<compile_context>
chip_gen: v7x
topology: tpu7x:2x2x1
jax: 0.10.0
libtpu: 0.0.40
codegen_flags: <defaults>
</compile_context>

<pallas_src>
import jax
import jax.numpy as jnp
from jax.experimental import pallas as pl
from jax.experimental.pallas import tpu as pltpu

ALPHA = 2  # HeatmapLoss.__init__ default
BETA = 4   # HeatmapLoss.__init__ default

_EPS = 1e-14         # same epsilon as the module's log(. + 1e-14)
_EXP_CLAMP = 88.0    # exp argument clamp: keeps exp(-x) finite in f32
_LANE = 128


def _heatmap_loss_kernel(x_ref, t_ref, o_ref):
    # Upcast in-kernel so bf16 callers stream 2 B/elem over HBM but all math
    # is f32.
    x = x_ref[...].astype(jnp.float32)
    t = t_ref[...].astype(jnp.float32)

    # s = sigmoid(x), computed stably: clamp the exp argument so the
    # denominator stays finite; f32 division (rcp + Newton under the hood)
    # gives an exact sigmoid.  s saturates to exactly 0 / 1 at the tails,
    # which is what makes the log(. + 1e-14) terms below match the module.
    e = jnp.exp(jnp.minimum(-x, _EXP_CLAMP))
    s = 1.0 / (1.0 + e)

    # Exact module formula, including the epsilons (tail-robust: s == 0 or
    # s == 1 both land on log(1e-14), same as the reference).
    log_s = jnp.log(s + _EPS)
    log_1ms = jnp.log((1.0 - s) + _EPS)

    center_id = (t == 1.0).astype(jnp.float32)
    other_id = 1.0 - center_id            # single compare + complement (VALU)

    one_minus_s = 1.0 - s
    one_minus_t = 1.0 - t
    omt2 = one_minus_t * one_minus_t

    # alpha = 2, beta = 4 (module defaults) as explicit multiplies.
    center_loss = -center_id * (one_minus_s * one_minus_s) * log_s
    other_loss = -other_id * (omt2 * omt2) * (s * s) * log_1ms

    o_ref[...] = (center_loss + other_loss).astype(o_ref.dtype)


def _round_up(v, m):
    return -(-v // m) * m


def heatmap_loss(inputs, targets, *, max_tile_rows=4096):
    """Elementwise focal heatmap loss. inputs/targets: NCHW float (f32/bf16).

    max_tile_rows must be a multiple of 16.  The default (4096) keeps the
    double-buffered working set at 12 MiB (f32), inside v5e's 16 MiB default
    scoped VMEM.
    """
    assert inputs.shape == targets.shape
    orig_shape = inputs.shape
    total = int(inputs.size)

    def _prep(a):
        # Stream f32 / bf16 natively; anything else is upcast once.
        if a.dtype in (jnp.float32, jnp.bfloat16):
            return a.reshape(-1)
        return a.reshape(-1).astype(jnp.float32)

    x = _prep(inputs)
    t = _prep(targets)

    out_dtype = jnp.promote_types(x.dtype, t.dtype)
    if not jnp.issubdtype(out_dtype, jnp.floating):
        out_dtype = jnp.float32

    # Row granularity: 8 sublanes for 32-bit, 16 for packed 16-bit operands.
    grain = 8
    if any(jnp.dtype(d).itemsize == 2 for d in (x.dtype, t.dtype, out_dtype)):
        grain = 16

    pad = 0
    if total % _LANE != 0 or total < grain * _LANE:
        # Rare ragged / tiny path: pad the flat arrays to whole lanes (and to
        # at least one `grain`-row tile).
        # TODO(synk): replace with an in-kernel valid-count mask to avoid the
        # extra HBM copies the pad/slice incur.
        padded = max(_round_up(total, _LANE), grain * _LANE)
        pad = padded - total
        x = jnp.pad(x, (0, pad))
        t = jnp.pad(t, (0, pad))
    rows = (total + pad) // _LANE

    x = x.reshape(rows, _LANE)
    t = t.reshape(rows, _LANE)

    # Tile rows: as large as possible to amortize per-step pipeline overhead,
    # but capped at ~rows/2 so the grid has >=2 steps (v7x megacore sharding
    # via dimension_semantics=("parallel",)).  pl.cdiv grid: the last block
    # may be partial — Pallas masks the boundary, so no divisor search and no
    # 8-row-tile cliff on unlucky shapes.
    tile_rows = min(max_tile_rows, _round_up(pl.cdiv(rows, 2), grain))
    tile_rows = max(tile_rows, grain)
    grid = (pl.cdiv(rows, tile_rows),)

    elems = rows * _LANE
    bytes_accessed = elems * (jnp.dtype(x.dtype).itemsize
                              + jnp.dtype(t.dtype).itemsize
                              + jnp.dtype(out_dtype).itemsize)

    out = pl.pallas_call(
        _heatmap_loss_kernel,
        out_shape=jax.ShapeDtypeStruct((rows, _LANE), out_dtype),
        grid_spec=pltpu.PrefetchScalarGridSpec(
            num_scalar_prefetch=0,
            grid=grid,
            in_specs=[
                pl.BlockSpec((tile_rows, _LANE), lambda i: (i, 0)),
                pl.BlockSpec((tile_rows, _LANE), lambda i: (i, 0)),
            ],
            out_specs=pl.BlockSpec((tile_rows, _LANE), lambda i: (i, 0)),
        ),
        compiler_params=pltpu.CompilerParams(
            dimension_semantics=("parallel",),
        ),
        cost_estimate=pl.CostEstimate(
            flops=20 * elems,
            transcendentals=3 * elems,   # exp + 2 logs (rcp rides the divide)
            bytes_accessed=bytes_accessed,
        ),
    )(x, t)

    out = out.reshape(-1)
    if pad:
        out = out[:total]
    return out.reshape(orig_shape)


def _reference(inputs, targets):
    """Pure-JAX mirror of the PyTorch module (exact formula, incl. epsilons)."""
    s = jax.nn.sigmoid(inputs.astype(jnp.float32))
    targets = targets.astype(jnp.float32)
    center_id = (targets == 1.0).astype(jnp.float32)
    other_id = (targets != 1.0).astype(jnp.float32)
    center_loss = -center_id * (1.0 - s) ** ALPHA * jnp.log(s + _EPS)
    other_loss = -other_id * (1.0 - targets) ** BETA * s ** ALPHA * jnp.log(
        1.0 - s + _EPS
    )
    return center_loss + other_loss


def _make_case(key, shape):
    k1, k2, k3 = jax.random.split(key, 3)
    inputs = jax.random.normal(k1, shape, dtype=jnp.float32)
    # Heatmap targets in [0, 1) with some exact peaks at 1.0 (center points).
    targets = jax.random.uniform(k2, shape, dtype=jnp.float32)
    peak_mask = jax.random.bernoulli(k3, 0.05, shape)
    targets = jnp.where(peak_mask, 1.0, targets * 0.99)
    return inputs, targets


if __name__ == "__main__":
    key = jax.random.PRNGKey(0)
    k_main, k_part, k_rag = jax.random.split(key, 3)

    # Primary case: NCHW, matching the PyTorch conv layout.
    shape = (2, 4, 16, 16)
    inputs, targets = _make_case(k_main, shape)
    out = jax.block_until_ready(heatmap_loss(inputs, targets))
    ref = _reference(inputs, targets)
    assert out.shape == shape and out.dtype == ref.dtype
    assert jnp.allclose(out, ref, atol=1e-5, rtol=1e-5), "mismatch (main)"

    # Partial-last-block case (rows not a multiple of the tile).
    shape_p = (2, 3, 20, 32)
    inputs_p, targets_p = _make_case(k_part, shape_p)
    out_p = jax.block_until_ready(heatmap_loss(inputs_p, targets_p))
    assert jnp.allclose(out_p, _reference(inputs_p, targets_p),
                        atol=1e-5, rtol=1e-5), "mismatch (partial block)"

    # Ragged case (total not a multiple of 128) -> exercises the pad path.
    shape_r = (1, 3, 7, 5)
    inputs_r, targets_r = _make_case(k_rag, shape_r)
    out_r = jax.block_until_ready(heatmap_loss(inputs_r, targets_r))
    assert jnp.allclose(out_r, _reference(inputs_r, targets_r),
                        atol=1e-5, rtol=1e-5), "mismatch (ragged)"

    print("KERNEL_OK")
</pallas_src>

<mosaic_0001>
module attributes {stable_mosaic.version = 11 : i64} {
  func.func @_heatmap_loss_kernel(%arg0: i32, %arg1: memref<8x128xf32, #tpu.memory_space<vmem>>, %arg2: memref<8x128xf32, #tpu.memory_space<vmem>>, %arg3: memref<8x128xf32, #tpu.memory_space<vmem>>) attributes {dimension_semantics = [#tpu.dimension_semantics<parallel>], iteration_bounds = array<i64: 2>, scalar_prefetch = 0 : i64, scratch_operands = 0 : i64, tpu.core_type = #tpu.core_type<tc>, window_params = [{transform_indices = @transform_0, window_bounds = array<i64: 8, 128>}, {transform_indices = @transform_1, window_bounds = array<i64: 8, 128>}, {transform_indices = @transform_2, window_bounds = array<i64: 8, 128>}]} {
    %c0 = arith.constant 0 : index
    %c0_0 = arith.constant 0 : index
    %0 = vector.load %arg1[%c0, %c0_0] : memref<8x128xf32, #tpu.memory_space<vmem>>, vector<8x128xf32>
    %c0_1 = arith.constant 0 : index
    %c0_2 = arith.constant 0 : index
    %1 = vector.load %arg2[%c0_1, %c0_2] : memref<8x128xf32, #tpu.memory_space<vmem>>, vector<8x128xf32>
    %cst = arith.constant 0.000000e+00 : f32
    %2 = vector.broadcast %cst : f32 to vector<8x128xf32>
    %3 = arith.subf %2, %0 : vector<8x128xf32>
    %cst_3 = arith.constant 8.800000e+01 : f32
    %4 = vector.broadcast %cst_3 : f32 to vector<8x128xf32>
    %5 = arith.minimumf %3, %4 : vector<8x128xf32>
    %6 = math.exp %5 : vector<8x128xf32>
    %cst_4 = arith.constant 1.000000e+00 : f32
    %7 = vector.broadcast %cst_4 : f32 to vector<8x128xf32>
    %8 = arith.addf %7, %6 : vector<8x128xf32>
    %cst_5 = arith.constant 1.000000e+00 : f32
    %9 = vector.broadcast %cst_5 : f32 to vector<8x128xf32>
    %10 = arith.divf %9, %8 : vector<8x128xf32>
    %cst_6 = arith.constant 9.99999982E-15 : f32
    %11 = vector.broadcast %cst_6 : f32 to vector<8x128xf32>
    %12 = arith.addf %10, %11 : vector<8x128xf32>
    %13 = math.log %12 : vector<8x128xf32>
    %cst_7 = arith.constant 1.000000e+00 : f32
    %14 = vector.broadcast %cst_7 : f32 to vector<8x128xf32>
    %15 = arith.subf %14, %10 : vector<8x128xf32>
    %cst_8 = arith.constant 9.99999982E-15 : f32
    %16 = vector.broadcast %cst_8 : f32 to vector<8x128xf32>
    %17 = arith.addf %15, %16 : vector<8x128xf32>
    %18 = math.log %17 : vector<8x128xf32>
    %cst_9 = arith.constant 1.000000e+00 : f32
    %19 = vector.broadcast %cst_9 : f32 to vector<8x128xf32>
    %20 = arith.cmpf oeq, %1, %19 : vector<8x128xf32>
    %21 = arith.extui %20 : vector<8x128xi1> to vector<8x128xi32>
    %22 = arith.sitofp %21 : vector<8x128xi32> to vector<8x128xf32>
    %cst_10 = arith.constant 1.000000e+00 : f32
    %23 = vector.broadcast %cst_10 : f32 to vector<8x128xf32>
    %24 = arith.subf %23, %22 : vector<8x128xf32>
    %cst_11 = arith.constant 1.000000e+00 : f32
    %25 = vector.broadcast %cst_11 : f32 to vector<8x128xf32>
    %26 = arith.subf %25, %10 : vector<8x128xf32>
    %cst_12 = arith.constant 1.000000e+00 : f32
    %27 = vector.broadcast %cst_12 : f32 to vector<8x128xf32>
    %28 = arith.subf %27, %1 : vector<8x128xf32>
    %29 = arith.mulf %28, %28 : vector<8x128xf32>
    %cst_13 = arith.constant 0.000000e+00 : f32
    %30 = vector.broadcast %cst_13 : f32 to vector<8x128xf32>
    %31 = arith.subf %30, %22 : vector<8x128xf32>
    %32 = arith.mulf %26, %26 : vector<8x128xf32>
    %33 = arith.mulf %31, %32 : vector<8x128xf32>
    %34 = arith.mulf %33, %13 : vector<8x128xf32>
    %cst_14 = arith.constant 0.000000e+00 : f32
    %35 = vector.broadcast %cst_14 : f32 to vector<8x128xf32>
    %36 = arith.subf %35, %24 : vector<8x128xf32>
    %37 = arith.mulf %29, %29 : vector<8x128xf32>
    %38 = arith.mulf %36, %37 : vector<8x128xf32>
    %39 = arith.mulf %10, %10 : vector<8x128xf32>
    %40 = arith.mulf %38, %39 : vector<8x128xf32>
    %41 = arith.mulf %40, %18 : vector<8x128xf32>
    %42 = arith.addf %34, %41 : vector<8x128xf32>
    %c0_15 = arith.constant 0 : index
    %c0_16 = arith.constant 0 : index
    %43 = vector.load %arg3[%c0_15, %c0_16] : memref<8x128xf32, #tpu.memory_space<vmem>>, vector<8x128xf32>
    tpu.vector_store %arg3[%c0_15, %c0_16], %42 {strides = array<i32>} : memref<8x128xf32, #tpu.memory_space<vmem>>, vector<8x128xf32>,
    return
  }
  func.func @transform_0(%arg0: i32) -> (i32, i32) {
    %c0_i32 = arith.constant 0 : i32
    %c0_i32_0 = arith.constant 0 : i32
    return %arg0, %c0_i32 : i32, i32
  }
  func.func @transform_1(%arg0: i32) -> (i32, i32) {
    %c0_i32 = arith.constant 0 : i32
    %c0_i32_0 = arith.constant 0 : i32
    return %arg0, %c0_i32 : i32, i32
  }
  func.func @transform_2(%arg0: i32) -> (i32, i32) {
    %c0_i32 = arith.constant 0 : i32
    %c0_i32_0 = arith.constant 0 : i32
    return %arg0, %c0_i32 : i32, i32
  }
}

</mosaic_0001>

<llo_original>
// kernel: tpu_custom_call.1
$region0: #{tpu_custom_call.1}
  #allocation0 [shape = 'u32[]', space=smem, size = 0x4, offset = 0x4, fixed_abs, tag = 'smem constant byte address 0x4 - core index']
  #allocation1 [shape = 'u32[144,128]{1,0:T(1,128)}', space=vmem, size = 0x12000, scoped, tag = 'internal scratch']
  %s0 = inlined_call_operand.hbm [shape: f32[16,128], index: 0, kind: input, shape index: {}]
  %s1 = inlined_call_operand.hbm [shape: f32[16,128], index: 1, kind: input, shape index: {}]
  %s2 = inlined_call_operand.hbm [shape: f32[16,128], index: 2, kind: output, shape index: {}]
  %s3 = sld [smem:[#allocation0]]
  $region49: #{tpu_custom_call.1} parent=0
    _
  %s5 = ssub.s32 1, %s3
  %s6 = scalar_select 0, %s5, %s3
  $region1: #{tpu_custom_call.1} parent=0
    #allocation2 [shape = 'u8[8192]{0}', space=vmem, size = 0x2000, scoped, tag = 'input window, operand 0']
    #allocation3 [shape = 's32[2]{0}', space=sflag, size = 0x8, scoped, tag = 'scoped memory for tpu_custom_call.1']
    #allocation4 [shape = 's32[2]{0}', space=sflag, size = 0x8, scoped, tag = 'scoped memory for tpu_custom_call.1']
    #allocation5 [shape = 'u8[8192]{0}', space=vmem, size = 0x2000, scoped, tag = 'input window, operand 1']
    #allocation6 [shape = 's32[2]{0}', space=sflag, size = 0x8, scoped, tag = 'scoped memory for tpu_custom_call.1']
    #allocation7 [shape = 'u8[8192]{0}', space=vmem, size = 0x2000, scoped, tag = 'output window, operand 0']
    %7 = vsyncpa [#allocation3], 0
    %s8 = scalar_lea.sflag [#allocation3], 1
    %9 = vsyncpa %s8, 0
    %10 = vsyncpa [#allocation6], 0
    %s11 = scalar_lea.sflag [#allocation6], 1
    %12 = vsyncpa %s11, 0
    %13 = vsyncpa [#allocation4], 0
    %s14 = scalar_lea.sflag [#allocation4], 1
    %15 = vsyncpa %s14, 0
    loop: start=0, step=1, limit=4
    $region2: #{tpu_custom_call.1} parent=1 // loop_pre_header
      _
    $region3: #{tpu_custom_call.1} parent=1 // loop_header
      %s17 = sphi 0, %s21
      %p18 = scmp.ge.s32.totalorder %s17, 4
      %s27 = sphi 0, %s29
      %s30 = sphi 0, %s27
      %s31 = sphi 0, %s30
      %s47 = sphi 0, %s31
      %s53 = sphi 0, %s55
      %s56 = sphi 0, %s53
      %s57 = sphi 0, %s56
      %s73 = sphi 0, %s57
      %s79 = sphi 0, %s81
      %s82 = sphi 0, %s79
      %s83 = sphi 0, %s82
      %s99 = sphi 0, %s83
    $region4: #{tpu_custom_call.1} parent=1 // loop_header_branch
      %20 = sbr.rel (%p18) target = $region8
    $region5: #{tpu_custom_call.1} parent=1 // loop_body
      %s22 = ssub.s32 %s17, 1
      %s23 = ssub.s32 %s17, 2
      %s24 = sadd.s32 %s17, 1
      %s25 = ssub.s32 %s17, %s24
      %p26 = scmp.eq.s32.totalorder %s25, 0
      %s28 = sadd.s32 %s27, 1
      %s29 = scalar_select %p26, %s27, %s28
      %p32 = pneg %p26
      %p33 = scmp.eq.s32.totalorder %s17, 1
      %p34 = por %p32, %p33
      %p35 = scmp.ne.s32.totalorder %s27, %s30
      %p36 = scmp.eq.s32.totalorder %s17, 0
      %p37 = por %p35, %p36
      %p38 = scmp.ne.s32.totalorder %s27, %s30
      %p39 = scmp.eq.s32.totalorder %s22, 1
      %p40 = por %p38, %p39
      %p41 = scmp.ne.s32.totalorder %s30, %s31
      %p42 = scmp.eq.s32.totalorder %s22, 0
      %p43 = por %p41, %p42
      %p44 = scmp.ne.s32.totalorder %s30, %s31
      %p45 = scmp.eq.s32.totalorder %s23, 1
      %p46 = por %p44, %p45
      %p48 = scmp.ne.s32.totalorder %s31, %s47
      %p49 = scmp.eq.s32.totalorder %s23, 0
      %p50 = por %p48, %p49
      %s51 = ssub.s32 %s17, %s24
      %p52 = scmp.eq.s32.totalorder %s51, 0
      %s54 = sadd.s32 %s53, 1
      %s55 = scalar_select %p52, %s53, %s54
      %p58 = pneg %p52
      %p59 = scmp.eq.s32.totalorder %s17, 1
      %p60 = por %p58, %p59
      %p61 = scmp.ne.s32.totalorder %s53, %s56
      %p62 = scmp.eq.s32.totalorder %s17, 0
      %p63 = por %p61, %p62
      %p64 = scmp.ne.s32.totalorder %s53, %s56
      %p65 = scmp.eq.s32.totalorder %s22, 1
      %p66 = por %p64, %p65
      %p67 = scmp.ne.s32.totalorder %s56, %s57
      %p68 = scmp.eq.s32.totalorder %s22, 0
      %p69 = por %p67, %p68
      %p70 = scmp.ne.s32.totalorder %s56, %s57
      %p71 = scmp.eq.s32.totalorder %s23, 1
      %p72 = por %p70, %p71
      %p74 = scmp.ne.s32.totalorder %s57, %s73
      %p75 = scmp.eq.s32.totalorder %s23, 0
      %p76 = por %p74, %p75
      %s77 = ssub.s32 %s17, %s24
      %p78 = scmp.eq.s32.totalorder %s77, 0
      %s80 = sadd.s32 %s79, 1
      %s81 = scalar_select %p78, %s79, %s80
      %p84 = pneg %p78
      %p85 = scmp.eq.s32.totalorder %s17, 1
      %p86 = por %p84, %p85
      %p87 = scmp.ne.s32.totalorder %s79, %s82
      %p88 = scmp.eq.s32.totalorder %s17, 0
      %p89 = por %p87, %p88
      %p90 = scmp.ne.s32.totalorder %s79, %s82
      %p91 = scmp.eq.s32.totalorder %s22, 1
      %p92 = por %p90, %p91
      %p93 = scmp.ne.s32.totalorder %s82, %s83
      %p94 = scmp.eq.s32.totalorder %s22, 0
      %p95 = por %p93, %p94
      %p96 = scmp.ne.s32.totalorder %s82, %s83
      %p97 = scmp.eq.s32.totalorder %s23, 1
      %p98 = por %p96, %p97
      %p100 = scmp.ne.s32.totalorder %s83, %s99
      %p101 = scmp.eq.s32.totalorder %s23, 0
      %p102 = por %p100, %p101
      %p103 = scmp.le.s32.totalorder 1, %s17
      %p104 = scmp.lt.s32.totalorder %s17, 3
      %p105 = pnand %p103, %p104
      %p106 = pneg %p105
      // Predicated region
      $region9: #{tpu_custom_call.1} parent=5 // pred_check
        _
      $region10: #{tpu_custom_call.1} parent=5 // pred_check_branch
        %108 = sbr.rel (%p105) target = $region12
      $region11: #{tpu_custom_call.1} parent=5 // pred_region
        %s109 = ssub.s32 %s17, 1
      $region12: #{tpu_custom_call.1} parent=5 // pred_fallthru
        _
      %p110 = scmp.lt.s32.totalorder %s17, 2
      // Predicated region
      $region13: #{tpu_custom_call.1} parent=5 // pred_check
        %p111 = pneg %p110
      $region14: #{tpu_custom_call.1} parent=5 // pred_check_branch
        %113 = sbr.rel (%p111) target = $region16
      $region15: #{tpu_custom_call.1} parent=5 // pred_region
        // Predicated region
        $region17: #{tpu_custom_call.1} parent=15 // pred_check
          %p114 = pneg %p37
        $region18: #{tpu_custom_call.1} parent=15 // pred_check_branch
          %116 = sbr.rel (%p114) target = $region20
        $region19: #{tpu_custom_call.1} parent=15 // pred_region
          %s117 = sand.u32 %s27, 1
          %s118 = scalar_lea.sflag [#allocation3], %s117
          %s119 = sand.u32 %s27, 1
          %s120 = smul.addr %s119, 8
          %s121 = scalar_lea.vmem [#allocation2], %s120
          %s123 = ssub.s32 128, 128
          %124 = vsyncadd %s118, %s123
          %s125 = smul.addr %s17, 128
          %s126 = scalar_lea.hbm %s0, %s125
          %s128 = sshll.u32 %s121, 4
          %s129 = int_to_ptr.vmem [resolvable:$true] %s128
          %131 = dma.hbm_to_vmem [thread:$0]  %s126, 128, %s129, %s118
        $region20: #{tpu_custom_call.1} parent=15 // pred_fallthru
          _
        // Predicated region
        $region21: #{tpu_custom_call.1} parent=15 // pred_check
          %p132 = pneg %p63
        $region22: #{tpu_custom_call.1} parent=15 // pred_check_branch
          %134 = sbr.rel (%p132) target = $region24
        $region23: #{tpu_custom_call.1} parent=15 // pred_region
          %s135 = sand.u32 %s53, 1
          %s136 = scalar_lea.sflag [#allocation6], %s135
          %s137 = sand.u32 %s53, 1
          %s138 = smul.addr %s137, 8
          %s139 = scalar_lea.vmem [#allocation5], %s138
          %s141 = ssub.s32 128, 128
          %142 = vsyncadd %s136, %s141
          %s143 = smul.addr %s17, 128
          %s144 = scalar_lea.hbm %s1, %s143
          %s146 = sshll.u32 %s139, 4
          %s147 = int_to_ptr.vmem [resolvable:$true] %s146
          %149 = dma.hbm_to_vmem [thread:$0]  %s144, 128, %s147, %s136
        $region24: #{tpu_custom_call.1} parent=15 // pred_fallthru
          _
      $region16: #{tpu_custom_call.1} parent=5 // pred_fallthru
        _
      %p150 = scmp.le.s32.totalorder 1, %s17
      %p151 = scmp.lt.s32.totalorder %s17, 3
      %p152 = pnand %p150, %p151
      %p153 = pneg %p152
      // Predicated region
      $region25: #{tpu_custom_call.1} parent=5 // pred_check
        _
      $region26: #{tpu_custom_call.1} parent=5 // pred_check_branch
        %155 = sbr.rel (%p152) target = $region28
      $region27: #{tpu_custom_call.1} parent=5 // pred_region
        %s156 = ssub.s32 %s17, 1
        %s157 = sand.u32 %s30, 1
        %s158 = scalar_lea.sflag [#allocation3], %s157
        %s159 = sand.u32 %s30, 1
        %s160 = smul.addr %s159, 8
        %s161 = scalar_lea.vmem [#allocation2], %s160
        // Predicated region
        $region29: #{tpu_custom_call.1} parent=27 // pred_check
          %p162 = pneg %p43
        $region30: #{tpu_custom_call.1} parent=27 // pred_check_branch
          %164 = sbr.rel (%p162) target = $region32
        $region31: #{tpu_custom_call.1} parent=27 // pred_region
          %165 = dma.done %s158, 128
        $region32: #{tpu_custom_call.1} parent=27 // pred_fallthru
          _
        %s166 = sand.u32 %s56, 1
        %s167 = scalar_lea.sflag [#allocation6], %s166
        %s168 = sand.u32 %s56, 1
        %s169 = smul.addr %s168, 8
        %s170 = scalar_lea.vmem [#allocation5], %s169
        // Predicated region
        $region33: #{tpu_custom_call.1} parent=27 // pred_check
          %p171 = pneg %p69
        $region34: #{tpu_custom_call.1} parent=27 // pred_check_branch
          %173 = sbr.rel (%p171) target = $region36
        $region35: #{tpu_custom_call.1} parent=27 // pred_region
          %174 = dma.done %s167, 128
        $region36: #{tpu_custom_call.1} parent=27 // pred_fallthru
          _
        %s175 = sand.u32 %s30, 1
        %s176 = scalar_lea.sflag [#allocation3], %s175
        %s177 = sand.u32 %s30, 1
        %s178 = smul.addr %s177, 8
        %s179 = scalar_lea.vmem [#allocation2], %s178
        %p180 = pneg %p43
        %p181 = pneg %p40
        %s182 = sand.u32 %s56, 1
        %s183 = scalar_lea.sflag [#allocation6], %s182
        %s184 = sand.u32 %s56, 1
        %s185 = smul.addr %s184, 8
        %s186 = scalar_lea.vmem [#allocation5], %s185
        %p187 = pneg %p69
        %p188 = pneg %p66
        %p189 = pneg %p95
        %p190 = pneg %p92
        %s191 = sand.u32 %s82, 1
        %s192 = scalar_lea.sflag [#allocation4], %s191
        %s193 = sand.u32 %s82, 1
        %s194 = smul.addr %s193, 8
        %s195 = scalar_lea.vmem [#allocation7], %s194
        %v196 = vld [vmem:[%s161] sm:$0xff]
        %v197 = vld [vmem:[%s170] sm:$0xff]
        %v198 = vsub.f32 0.0, %v196
        %v199 = vmin.f32 %v198, 88.0
        %v200 = vmul.f32 %v199, 1.442695
        %v201 = vpow.pop %v200
        %v202 = vadd.f32 %v201, 1.0
        %v203 = vrcp.pop %v202
        %v204 = vmul.f32 1.0, %v203
        %v205 = vadd.f32 %v204, 1e-14
        %v206 = vlog2.pop %v205
        %v207 = vmul.f32 %v206, 0.6931472
        %v208 = vsub.f32 1.0, %v204
        %v209 = vadd.f32 %v208, 1e-14
        %v210 = vlog2.pop %v209
        %v211 = vmul.f32 %v210, 0.6931472
        %vm212 = vcmp.eq.f32.partialorder %v197, 1.0
        %v213 = vsel %vm212, 1, 0
        %v214 = vcvt.s32.f32 %v213
        %v215 = vsub.f32 1.0, %v214
        %v216 = vsub.f32 1.0, %v197
        %v217 = vmul.f32 %v216, %v216
        %v218 = vsub.f32 0.0, %v214
        %v219 = vmul.f32 %v208, %v208
        %v220 = vmul.f32 %v218, %v219
        %v221 = vmul.f32 %v220, %v207
        %v222 = vsub.f32 0.0, %v215
        %v223 = vmul.f32 %v217, %v217
        %v224 = vmul.f32 %v222, %v223
        %v225 = vmul.f32 %v204, %v204
        %v226 = vmul.f32 %v224, %v225
        %v227 = vmul.f32 %v226, %v211
        %v228 = vadd.f32 %v221, %v227
        %229 = vst [vmem:[%s195] sm:$0xff] %v228
        %s230 = sand.u32 %s82, 1
        %s231 = scalar_lea.sflag [#allocation4], %s230
        %s232 = sand.u32 %s82, 1
        %s233 = smul.addr %s232, 8
        %s234 = scalar_lea.vmem [#allocation7], %s233
        // Predicated region
        $region37: #{tpu_custom_call.1} parent=27 // pred_check
          %p235 = pneg %p92
        $region38: #{tpu_custom_call.1} parent=27 // pred_check_branch
          %237 = sbr.rel (%p235) target = $region40
        $region39: #{tpu_custom_call.1} parent=27 // pred_region
          %s239 = ssub.s32 128, 128
          %240 = vsyncadd %s231, %s239
          %s241 = smul.addr %s22, 128
          %s242 = scalar_lea.hbm %s2, %s241
          %s244 = sshll.u32 %s234, 4
          %s245 = int_to_ptr.vmem [resolvable:$true] %s244
          %247 = dma.vmem_to_hbm [thread:$0]  %s245, 128, %s242, %s231
        $region40: #{tpu_custom_call.1} parent=27 // pred_fallthru
          _
      $region28: #{tpu_custom_call.1} parent=5 // pred_fallthru
        _
      %p248 = scmp.le.s32.totalorder 2, %s17
      // Predicated region
      $region41: #{tpu_custom_call.1} parent=5 // pred_check
        %p249 = pneg %p248
      $region42: #{tpu_custom_call.1} parent=5 // pred_check_branch
        %251 = sbr.rel (%p249) target = $region44
      $region43: #{tpu_custom_call.1} parent=5 // pred_region
        %s252 = ssub.s32 %s17, 2
        // Predicated region
        $region45: #{tpu_custom_call.1} parent=43 // pred_check
          %p253 = pneg %p98
        $region46: #{tpu_custom_call.1} parent=43 // pred_check_branch
          %255 = sbr.rel (%p253) target = $region48
        $region47: #{tpu_custom_call.1} parent=43 // pred_region
          %s256 = sand.u32 %s83, 1
          %s257 = scalar_lea.sflag [#allocation4], %s256
          %s258 = sand.u32 %s83, 1
          %s259 = smul.addr %s258, 8
          %s260 = scalar_lea.vmem [#allocation7], %s259
          %261 = dma.done %s257, 128
        $region48: #{tpu_custom_call.1} parent=43 // pred_fallthru
          _
      $region44: #{tpu_custom_call.1} parent=5 // pred_fallthru
        _
    $region6: #{tpu_custom_call.1} parent=1 // loop_footer
      %s21 = sadd.s32 1, %s17
    $region7: #{tpu_custom_call.1} parent=1 // loop_footer_branch
      %16 = sbr.rel target = $region3
    $region8: #{tpu_custom_call.1} parent=1 // loop_exit
      _
    %262 = vsyncpa [#allocation3], 1
    %s263 = scalar_lea.sflag [#allocation3], 1
    %264 = vsyncpa %s263, 1
    %265 = vsyncpa [#allocation6], 1
    %s266 = scalar_lea.sflag [#allocation6], 1
    %267 = vsyncpa %s266, 1
    %268 = vsyncpa [#allocation4], 1
    %s269 = scalar_lea.sflag [#allocation4], 1
    %270 = vsyncpa %s269, 1

</llo_original>
